<compile_context>
chip_gen: v5e
topology: v5e:2x2
jax: 0.10.0
libtpu: 0.0.40
codegen_flags: <defaults>
</compile_context>

<pallas_src>
import math

import jax
import jax.numpy as jnp
from jax.experimental import pallas as pl
from jax.experimental.pallas import tpu as pltpu


def _build_pe(d_model: int, max_len: int = 5000, dtype=jnp.float32):
    """Sinusoidal table identical to the PyTorch __init__, pre-cast to the activation dtype."""
    position = jnp.arange(max_len, dtype=jnp.float32)[:, None]                  # [max_len, 1]
    div_term = jnp.exp(
        jnp.arange(0, d_model, 2, dtype=jnp.float32) * (-math.log(10000.0) / d_model)
    )                                                                           # [ceil(d/2)]
    args = position * div_term                                                  # [max_len, ceil(d/2)]
    pe = jnp.zeros((max_len, d_model), dtype=jnp.float32)
    pe = pe.at[:, 0::2].set(jnp.sin(args))
    pe = pe.at[:, 1::2].set(jnp.cos(args)[:, : d_model // 2])
    return pe.astype(dtype)


# ---------------- kernels ----------------

def _pe_add_seq_tiled_kernel(x_ref, pe_ref, o_ref):
    # x_ref / pe_ref / o_ref: (ts, D_eff) 2-D tiles (batch dim squeezed away).
    o_ref[...] = x_ref[...] + pe_ref[...]


def _pe_add_batch_blocked_kernel(x_ref, pe_ref, o_ref):
    # x_ref / o_ref: (tb, S_eff, D_eff); pe_ref: (S_eff, D_eff) -> major-dim broadcast add.
    o_ref[...] = x_ref[...] + pe_ref[...][None, :, :]


# ---------------- wrapper ----------------

def positional_encoding_forward(x: jax.Array, pe: jax.Array,
                                *, target_block_bytes: int = 4 * 1024 * 1024) -> jax.Array:
    """x: [B, S, D]; pe: [max_len, D] (pre-cast to x.dtype at init). Returns x + pe[:S][None]."""
    B, S, D = x.shape
    max_len = pe.shape[0]
    assert pe.shape[1] == D and max_len >= S

    if pe.dtype != x.dtype:
        # Fallback only: store the table pre-cast at module init to avoid this per-call cast.
        pe = pe.astype(x.dtype)

    dtype_bytes = jnp.dtype(x.dtype).itemsize
    sub = max(8, 32 // dtype_bytes)          # sublane multiple: 8 f32, 16 bf16, 32 int8/fp8

    # ---- lane-dense fold: view each (S, D) slab as (S*D/L, L), L a multiple of 128 ----
    D_eff, S_eff = D, S
    if D % 128 != 0 and (S * D) % 128 == 0:
        for L in (1024, 512, 256, 128):
            if (S * D) % L == 0:
                D_eff = L
                break
        S_eff = (S * D) // D_eff
    x_eff = x.reshape(B, S_eff, D_eff)       # contiguous row-major reshape: no data movement

    # ---- pe buffer in the effective layout, avoiding a slice copy whenever possible ----
    if D_eff == D:
        pe_eff = pe                                              # full (max_len, D), no copy
        pe_rows = max_len
    elif (max_len * D) % D_eff == 0:
        pe_eff = pe.reshape((max_len * D) // D_eff, D_eff)       # contiguous reshape, no copy
        pe_rows = pe_eff.shape[0]
    else:
        pe_eff = pe[:S].reshape(S_eff, D_eff)                    # small fallback copy (S*D elems)
        pe_rows = S_eff

    # ---- sequence tiling: multiple of the sublane pack, ~target_block_bytes per block ----
    row_bytes = D_eff * dtype_bytes
    ts = max(sub, (target_block_bytes // row_bytes) // sub * sub)
    ts = min(ts, S_eff)
    if ts < S_eff:
        # prefer a ts that divides S_eff so the last s-tile is not a masked partial block
        t = ts
        while t >= sub and S_eff % t != 0:
            t -= sub
        if t >= sub and S_eff % t == 0:
            ts = t
    num_s = pl.cdiv(S_eff, ts)

    cost = pl.CostEstimate(
        flops=B * S * D,
        transcendentals=0,
        bytes_accessed=(2 * B * S * D + S * D) * dtype_bytes,
    )

    if num_s > 1:
        # -------- long-sequence path: s-tiled grid, batch squeezed --------
        block_bytes = ts * row_bytes
        vmem_limit = int(min(48 * 1024 * 1024,
                             max(16 * 1024 * 1024, 6 * block_bytes + 4 * 1024 * 1024)))
        out = pl.pallas_call(
            _pe_add_seq_tiled_kernel,
            out_shape=jax.ShapeDtypeStruct((B, S_eff, D_eff), x.dtype),
            grid_spec=pltpu.PrefetchScalarGridSpec(
                num_scalar_prefetch=0,
                grid=(num_s, B),             # s outer, batch inner -> pe tile reused across B
                in_specs=[
                    pl.BlockSpec((pl.Squeezed(), ts, D_eff), lambda s, b: (b, s, 0)),
                    pl.BlockSpec((ts, D_eff), lambda s, b: (s, 0)),
                ],
                out_specs=pl.BlockSpec((pl.Squeezed(), ts, D_eff), lambda s, b: (b, s, 0)),
            ),
            compiler_params=pltpu.CompilerParams(
                dimension_semantics=("parallel", "parallel"),
                vmem_limit_bytes=vmem_limit,
            ),
            cost_estimate=cost,
        )(x_eff, pe_eff)
    else:
        # -------- short-sequence path: whole sequence in one tile, block the batch dim --------
        slab_bytes = S_eff * row_bytes
        tb = min(B, max(1, target_block_bytes // slab_bytes))
        num_b = pl.cdiv(B, tb)

        # pe block must satisfy the (8,128) rule: slice only if S_eff is neither a multiple
        # of 8 nor the full pe extent (tiny S*D-element copy; common shapes avoid it).
        if S_eff % 8 != 0 and pe_rows != S_eff:
            pe_eff = pe_eff[:S_eff]

        block_bytes = tb * slab_bytes
        vmem_limit = int(min(48 * 1024 * 1024,
                             max(16 * 1024 * 1024, 6 * block_bytes + 4 * 1024 * 1024)))
        out = pl.pallas_call(
            _pe_add_batch_blocked_kernel,
            out_shape=jax.ShapeDtypeStruct((B, S_eff, D_eff), x.dtype),
            grid_spec=pltpu.PrefetchScalarGridSpec(
                num_scalar_prefetch=0,
                grid=(num_b,),               # single (leading) parallel axis over batch blocks
                in_specs=[
                    pl.BlockSpec((tb, S_eff, D_eff), lambda b: (b, 0, 0)),
                    pl.BlockSpec((S_eff, D_eff), lambda b: (0, 0)),
                ],
                out_specs=pl.BlockSpec((tb, S_eff, D_eff), lambda b: (b, 0, 0)),
            ),
            compiler_params=pltpu.CompilerParams(
                dimension_semantics=("parallel",),
                vmem_limit_bytes=vmem_limit,
            ),
            cost_estimate=cost,
        )(x_eff, pe_eff)

    return out.reshape(B, S, D)


if __name__ == "__main__":
    B, S, D = 2, 8, 32
    max_len = 5000

    key = jax.random.PRNGKey(0)
    x = jax.random.normal(key, (B, S, D), dtype=jnp.float32)

    # pe is built once at "module init", already in the activation dtype (no per-call cast).
    pe = _build_pe(D, max_len=max_len, dtype=x.dtype)

    out = jax.block_until_ready(positional_encoding_forward(x, pe))

    # reference check in plain JAX
    ref = x + pe[:S, :][None, :, :]
    assert out.shape == (B, S, D)
    assert out.dtype == x.dtype
    assert jnp.allclose(out, ref, atol=1e-6, rtol=1e-6), "mismatch vs reference"

    # TODO(synk): odd d_model is not exercised (the PyTorch buffer construction also assumes even).
    print("KERNEL_OK")
</pallas_src>

<mosaic_0001>
module attributes {stable_mosaic.version = 11 : i64} {
  func.func @_pe_add_batch_blocked_kernel(%arg0: i32, %arg1: memref<2x1x256xf32, #tpu.memory_space<vmem>>, %arg2: memref<1x256xf32, #tpu.memory_space<vmem>>, %arg3: memref<2x1x256xf32, #tpu.memory_space<vmem>>) attributes {dimension_semantics = [#tpu.dimension_semantics<parallel>], iteration_bounds = array<i64: 1>, scalar_prefetch = 0 : i64, scratch_operands = 0 : i64, tpu.core_type = #tpu.core_type<tc>, window_params = [{transform_indices = @transform_0, window_bounds = array<i64: 2, 1, 256>}, {pipeline_mode = #tpu.pipeline_mode<synchronous>, transform_indices = @transform_1, window_bounds = array<i64: 1, 256>}, {transform_indices = @transform_2, window_bounds = array<i64: 2, 1, 256>}]} {
    %c0 = arith.constant 0 : index
    %c0_0 = arith.constant 0 : index
    %c0_1 = arith.constant 0 : index
    %0 = vector.load %arg1[%c0, %c0_0, %c0_1] : memref<2x1x256xf32, #tpu.memory_space<vmem>>, vector<2x1x256xf32>
    %c0_2 = arith.constant 0 : index
    %c0_3 = arith.constant 0 : index
    %1 = vector.load %arg2[%c0_2, %c0_3] : memref<1x256xf32, #tpu.memory_space<vmem>>, vector<1x256xf32>
    %2 = vector.shape_cast %1 : vector<1x256xf32> to vector<1x1x256xf32>
    %3 = vector.broadcast %2 : vector<1x1x256xf32> to vector<2x1x256xf32>
    %4 = arith.addf %0, %3 : vector<2x1x256xf32>
    %c0_4 = arith.constant 0 : index
    %c0_5 = arith.constant 0 : index
    %c0_6 = arith.constant 0 : index
    %5 = vector.load %arg3[%c0_4, %c0_5, %c0_6] : memref<2x1x256xf32, #tpu.memory_space<vmem>>, vector<2x1x256xf32>
    tpu.vector_store %arg3[%c0_4, %c0_5, %c0_6], %4 {strides = array<i32>} : memref<2x1x256xf32, #tpu.memory_space<vmem>>, vector<2x1x256xf32>,
    return
  }
  func.func @transform_0(%arg0: i32) -> (i32, i32, i32) {
    %c0_i32 = arith.constant 0 : i32
    %c0_i32_0 = arith.constant 0 : i32
    %c0_i32_1 = arith.constant 0 : i32
    return %arg0, %c0_i32, %c0_i32_0 : i32, i32, i32
  }
  func.func @transform_1(%arg0: i32) -> (i32, i32) {
    %c0_i32 = arith.constant 0 : i32
    %c0_i32_0 = arith.constant 0 : i32
    %c0_i32_1 = arith.constant 0 : i32
    return %c0_i32, %c0_i32_0 : i32, i32
  }
  func.func @transform_2(%arg0: i32) -> (i32, i32, i32) {
    %c0_i32 = arith.constant 0 : i32
    %c0_i32_0 = arith.constant 0 : i32
    %c0_i32_1 = arith.constant 0 : i32
    return %arg0, %c0_i32, %c0_i32_0 : i32, i32, i32
  }
}

</mosaic_0001>

<llo_original>
// kernel: tpu_custom_call.1
$region0: #{tpu_custom_call.1}
  #allocation0 [shape = 'u32[]', space=smem, size = 0x4, offset = 0x4, fixed_abs, tag = 'smem constant byte address 0x4 - core index']
  #allocation1 [shape = 'u32[72,128]{1,0:T(1,128)}', space=vmem, size = 0x9000, scoped, tag = 'internal scratch']
  %s0 = inlined_call_operand.hbm [shape: f32[2,1,256], index: 0, kind: input, shape index: {}]
  %s1 = inlined_call_operand.hbm [shape: f32[1,256], index: 1, kind: input, shape index: {}]
  %s2 = inlined_call_operand.hbm [shape: f32[2,1,256], index: 2, kind: output, shape index: {}]
  %s3 = sld [smem:[#allocation0]]
  $region26: #{tpu_custom_call.1} parent=0
    _
  %s5 = ssub.s32 1, %s3
  %s6 = scalar_select 0, %s5, %s3
  $region1: #{tpu_custom_call.1} parent=0
    #allocation2 [shape = 'u8[2048]{0}', space=vmem, size = 0x800, scoped, tag = 'input window, operand 0, single buffered']
    #allocation3 [shape = 's32[1]{0}', space=sflag, size = 0x4, scoped, tag = 'scoped memory for tpu_custom_call.1']
    #allocation4 [shape = 's32[1]{0}', space=sflag, size = 0x4, scoped, tag = 'scoped memory for tpu_custom_call.1']
    #allocation5 [shape = 'u8[1024]{0}', space=vmem, size = 0x400, scoped, tag = 'input window, operand 1, single buffered']
    #allocation6 [shape = 's32[1]{0}', space=sflag, size = 0x4, scoped, tag = 'scoped memory for tpu_custom_call.1']
    #allocation7 [shape = 'u8[2048]{0}', space=vmem, size = 0x800, scoped, tag = 'output window, operand 0, single buffered']
    %7 = vsyncpa [#allocation3], 0
    %8 = vsyncpa [#allocation6], 0
    %9 = vsyncpa [#allocation4], 0
    // Predicated region
    $region2: #{tpu_custom_call.1} parent=1 // pred_check
      _
    $region3: #{tpu_custom_call.1} parent=1 // pred_check_branch
      %11 = sbr.rel (0) target = $region5
    $region4: #{tpu_custom_call.1} parent=1 // pred_region
      %13 = vsyncadd [#allocation3], 0
      %s14 = sshll.u32 %s0, 4
      %s15 = int_to_ptr.hbm [resolvable:$true] %s14
      %s16 = sshll.u32 [#allocation2], 4
      %s17 = int_to_ptr.vmem [resolvable:$true] %s16
      %22 = dma.hbm_to_vmem [thread:$0]  %s15, 64, %s17, [#allocation3], 32, 32, 2
    $region5: #{tpu_custom_call.1} parent=1 // pred_fallthru
      _
    // Predicated region
    $region6: #{tpu_custom_call.1} parent=1 // pred_check
      _
    $region7: #{tpu_custom_call.1} parent=1 // pred_check_branch
      %24 = sbr.rel (0) target = $region9
    $region8: #{tpu_custom_call.1} parent=1 // pred_region
      %26 = vsyncadd [#allocation6], 0
      %s28 = sshll.u32 %s1, 4
      %s29 = int_to_ptr.hbm [resolvable:$true] %s28
      %s30 = sshll.u32 [#allocation5], 4
      %s31 = int_to_ptr.vmem [resolvable:$true] %s30
      %33 = dma.hbm_to_vmem [thread:$0]  %s29, 32, %s31, [#allocation6]
    $region9: #{tpu_custom_call.1} parent=1 // pred_fallthru
      _
    // Predicated region
    $region10: #{tpu_custom_call.1} parent=1 // pred_check
      _
    $region11: #{tpu_custom_call.1} parent=1 // pred_check_branch
      %35 = sbr.rel (0) target = $region13
    $region12: #{tpu_custom_call.1} parent=1 // pred_region
      %37 = dma.done [#allocation3], 64
    $region13: #{tpu_custom_call.1} parent=1 // pred_fallthru
      _
    // Predicated region
    $region14: #{tpu_custom_call.1} parent=1 // pred_check
      _
    $region15: #{tpu_custom_call.1} parent=1 // pred_check_branch
      %39 = sbr.rel (0) target = $region17
    $region16: #{tpu_custom_call.1} parent=1 // pred_region
      %41 = dma.done [#allocation6], 32
    $region17: #{tpu_custom_call.1} parent=1 // pred_fallthru
      _
    %v42 = vld [vmem:[#allocation2] sm:$0x3]
    %v43 = vld [vmem:[#allocation2 + $0x2] sm:$0x3]
    %v44 = vld [vmem:[#allocation5] sm:$0x3]
    %v45 = vadd.f32 %v42, %v44
    %v46 = vadd.f32 %v43, %v44
    %v47 = vlaneseq
    %vm48 = vcmp.ge.s32.totalorder %v47, 0
    %vm49 = vcmp.lt.s32.totalorder %v47, 256
    %vm50 = vmand %vm48, %vm49
    %51 = vst.msk [vmem:[#allocation7] sm:$0x3] %vm50, %v45
    %52 = vst.msk [vmem:[#allocation7 + $0x2] sm:$0x3] %vm50, %v46
    // Predicated region
    $region18: #{tpu_custom_call.1} parent=1 // pred_check
      _
    $region19: #{tpu_custom_call.1} parent=1 // pred_check_branch
      %54 = sbr.rel (0) target = $region21
    $region20: #{tpu_custom_call.1} parent=1 // pred_region
      %56 = vsyncadd [#allocation4], 0
      %s57 = sshll.u32 [#allocation7], 4
      %s58 = int_to_ptr.vmem [resolvable:$true] %s57
      %s59 = sshll.u32 %s2, 4
      %s60 = int_to_ptr.hbm [resolvable:$true] %s59
      %65 = dma.vmem_to_hbm [thread:$0]  %s58, 64, %s60, [#allocation4], 32, 32, 2
    $region21: #{tpu_custom_call.1} parent=1 // pred_fallthru
      _
    // Predicated region
    $region22: #{tpu_custom_call.1} parent=1 // pred_check
      _
    $region23: #{tpu_custom_call.1} parent=1 // pred_check_branch
      %67 = sbr.rel (0) target = $region25
    $region24: #{tpu_custom_call.1} parent=1 // pred_region
      %69 = dma.done [#allocation4], 64
    $region25: #{tpu_custom_call.1} parent=1 // pred_fallthru
      _
    %70 = vsyncpa [#allocation3], 1
    %71 = vsyncpa [#allocation6], 1
    %72 = vsyncpa [#allocation4], 1

</llo_original>
